<compile_context>
chip_gen: v7x
topology: tpu7x:2x2x1
jax: 0.10.0
libtpu: 0.0.40
codegen_flags: <defaults>
</compile_context>

<pallas_src>
import functools

import jax
import jax.numpy as jnp
from jax.experimental import pallas as pl
from jax.experimental.pallas import tpu as pltpu

_PAD_LABEL = jnp.iinfo(jnp.int32).min  # label assigned to padded anchor rows
# TODO(synk): if real labels can equal int32-min, pick a different pad sentinel.

_ROW_ALIGN = 32  # native sublane tile for int8 (32), bf16 (16), f32 (8)


def _round_up(x, m):
    return (x + m - 1) // m * m


def _pick_tile_rows(A, C, dim, feat_bytes, requested):
    """Largest row tile whose per-step working set fits a conservative VMEM
    budget (valid for v7x 64 MiB / v5e-v6e scoped defaults), capped so the grid
    has >= 2 steps when there are >= 2 aligned tiles of work (v7x megacore)."""
    requested = max(_ROW_ALIGN, _round_up(int(requested), _ROW_ALIGN))
    a_al = _round_up(max(int(A), 1), _ROW_ALIGN)
    contrast_bytes = dim * C * feat_bytes            # resident (Buffered(1))
    budget = max(26 * 1024 * 1024 - contrast_bytes, 2 * 1024 * 1024)
    # ~6 live [1, C] f32-equivalent temporaries per anchor row (logits, exp,
    # iota, bool masks, selects) + double-buffered feature row + int8 mask row.
    per_row = 6 * C * 4 + 2 * dim * feat_bytes + 2 * C + 64
    tA = min(requested, a_al, max(budget // per_row, _ROW_ALIGN))
    if a_al >= 2 * _ROW_ALIGN:
        # At most half the rows per tile so both v7x TensorCores get grid steps.
        tA = min(tA, _round_up((a_al + 1) // 2, _ROW_ALIGN))
    return max(_ROW_ALIGN, (tA // _ROW_ALIGN) * _ROW_ALIGN)


def _vmem_limit(tA, C, dim, feat_bytes, mask_bytes_per_row):
    """Explicit scoped-VMEM limit from the actual footprint (+25% headroom)."""
    footprint = (dim * C * feat_bytes                # resident contrast (x1)
                 + 2 * tA * dim * feat_bytes         # anchor tile, double-buffered
                 + 2 * tA * 4                        # output tile, double-buffered
                 + 2 * tA * mask_bytes_per_row       # int8 mask tile (mask path)
                 + 6 * tA * C * 4                    # live f32 intermediates
                 + 3 * 4 * C + 2 * 4 * tA)           # [1, C] labels/keep, [tA, 1] labels
    return int(min(max(int(footprint * 1.25) + (2 << 20), 16 << 20), 60 << 20))


def _mean_log_prob_pos(logits, mask_b, lmask_b):
    """Per-row mean log-prob over positives (folded, boolean-select form).

    logits: [tA, C] f32 (already scaled by 1/T); mask_b / lmask_b: [tA, C] bool.
    sum(mask*log_prob) = sum(mask*logits) - log(denom)*sum(mask), so no [tA, C]
    log_prob tensor and no f32 mask multiplies.  Returns [tA, 1] f32.
    """
    logits_max = jnp.max(logits, axis=1, keepdims=True)              # [tA, 1]
    l = logits - logits_max
    zero = jnp.zeros_like(l)
    denom = jnp.sum(jnp.where(lmask_b, jnp.exp(l), zero),
                    axis=1, keepdims=True)                           # [tA, 1]
    sum_mask = jnp.sum(jnp.where(mask_b, 1.0, 0.0),
                       axis=1, keepdims=True)                        # [tA, 1]
    sum_mlog = jnp.sum(jnp.where(mask_b, l, zero),
                       axis=1, keepdims=True)                        # [tA, 1]
    num = sum_mlog - jnp.log(denom) * sum_mask
    # One divide per row -> EUP approximate reciprocal (free bundle slot).
    return num * pl.reciprocal(sum_mask + 1e-12, approx=True)


def _supcon_labels_kernel(a_ref, ct_ref, alab_ref, clab_ref, keep_ref, out_ref, *,
                          inv_temperature, tile_rows):
    """Labels / eye path: masks rebuilt in-kernel from int32 labels.

    a_ref:    [tA, D] bf16/f32   anchor feature tile
    ct_ref:   [D,  C] bf16/f32   contrast features, transposed, VMEM-resident
    alab_ref: [tA, 1] int32      anchor labels (padded rows get _PAD_LABEL)
    clab_ref: [1,  C] int32      contrast labels
    keep_ref: [1,  C] int32      1 keep / 0 drop (label == 92 columns)
    out_ref:  [tA, 1] f32        mean_log_prob_pos per anchor row
    """
    logits = jax.lax.dot_general(
        a_ref[...], ct_ref[...], (((1,), (0,)), ((), ())),
        preferred_element_type=jnp.float32) * inv_temperature        # [tA, C]

    n_cols = logits.shape[1]
    row0 = pl.program_id(0) * tile_rows
    row_g = jax.lax.broadcasted_iota(jnp.int32, (tile_rows, 1), 0) + row0
    col_idx = jax.lax.broadcasted_iota(jnp.int32, (tile_rows, n_cols), 1)
    not_self = col_idx != row_g                                      # bool [tA, C]

    lmask_b = jnp.logical_and(not_self, keep_ref[...] != 0)          # bool [tA, C]
    pos_b = alab_ref[...] == clab_ref[...]                           # bool [tA, C]
    mask_b = jnp.logical_and(pos_b, lmask_b)

    out_ref[...] = _mean_log_prob_pos(logits, mask_b, lmask_b)


def _supcon_mask_kernel(a_ref, ct_ref, mask_ref, out_ref, *,
                        inv_temperature, tile_rows):
    """Explicit-mask path: 0/1 positive mask shipped as int8, diagonal in-kernel."""
    logits = jax.lax.dot_general(
        a_ref[...], ct_ref[...], (((1,), (0,)), ((), ())),
        preferred_element_type=jnp.float32) * inv_temperature        # [tA, C]

    n_cols = logits.shape[1]
    row0 = pl.program_id(0) * tile_rows
    row_g = jax.lax.broadcasted_iota(jnp.int32, (tile_rows, 1), 0) + row0
    col_idx = jax.lax.broadcasted_iota(jnp.int32, (tile_rows, n_cols), 1)
    lmask_b = col_idx != row_g                                       # bool [tA, C]

    mask_b = jnp.logical_and(mask_ref[...] != 0, lmask_b)
    out_ref[...] = _mean_log_prob_pos(logits, mask_b, lmask_b)


def supcon_loss(features, labels=None, mask=None, *,
                temperature=0.1, contrast_mode='one', base_temperature=0.07,
                tile_rows=256, feature_dtype=jnp.bfloat16):
    """JAX/Pallas port of SupConLoss.forward (losses/CCLoss.py)."""
    if features.ndim < 3:
        raise ValueError('`features` needs to be [bsz, n_views, ...]')
    if features.ndim > 3:
        features = features.reshape(features.shape[0], features.shape[1], -1)
    if labels is not None and mask is not None:
        raise ValueError('Cannot define both `labels` and `mask`')

    bsz, n_views, dim = features.shape
    contrast_count = n_views
    # torch.cat(torch.unbind(features, dim=1), dim=0) -> view-major stacking.
    contrast_feature = jnp.concatenate(
        [features[:, v] for v in range(n_views)], axis=0)             # [C, D]

    if contrast_mode == 'one':
        anchor_feature, anchor_count = features[:, 0], 1
    elif contrast_mode == 'all':
        anchor_feature, anchor_count = contrast_feature, contrast_count
    else:
        raise ValueError('Unknown mode: {}'.format(contrast_mode))

    A = bsz * anchor_count
    C = bsz * contrast_count
    feat_bytes = jnp.dtype(feature_dtype).itemsize

    tA = _pick_tile_rows(A, C, dim, feat_bytes, tile_rows)
    A_pad = _round_up(A, tA)
    grid = (A_pad // tA,)

    anchor_feature = jnp.pad(anchor_feature.astype(feature_dtype),
                             ((0, A_pad - A), (0, 0)))                # [A_pad, D]
    # Pre-transposed so the MXU sees its native [tA, D] x [D, C] contraction and
    # the resident contrast block needs no per-step relayout.
    contrast_feature_t = contrast_feature.astype(feature_dtype).T     # [D, C]

    common_kwargs = dict(
        out_shape=jax.ShapeDtypeStruct((A_pad, 1), jnp.float32),
        grid=grid,
        out_specs=pl.BlockSpec((tA, 1), lambda i: (i, 0)),
    )

    if mask is None:
        # Labels / eye path: no [A, C] masks in HBM, only labels + keep vector.
        if labels is None:
            base_labels = jnp.arange(bsz, dtype=jnp.int32)   # reproduces eye(bsz)
            col_keep = jnp.ones((1, C), jnp.int32)
        else:
            labels = jnp.asarray(labels).reshape(-1).astype(jnp.int32)
            if labels.shape[0] != bsz:
                raise ValueError('Num of labels does not match num of features')
            base_labels = labels
            # PyTorch: logits_mask[:, ori_labels == 92] = 0 (exact for n_views==1).
            # TODO(synk): boolean column index is ill-defined in the reference for
            # n_views > 1; we generalize by tiling the per-sample condition.
            col_keep = jnp.where(jnp.tile(base_labels == 92, contrast_count),
                                 0, 1).astype(jnp.int32).reshape(1, C)

        anchor_labels = jnp.tile(base_labels, anchor_count)
        anchor_labels = jnp.pad(anchor_labels, (0, A_pad - A),
                                constant_values=_PAD_LABEL).reshape(A_pad, 1)
        contrast_labels = jnp.tile(base_labels, contrast_count).reshape(1, C)

        cost = pl.CostEstimate(
            flops=2 * A_pad * C * dim,
            transcendentals=A_pad * (C + 2),
            bytes_accessed=(A_pad + C) * dim * feat_bytes
                           + 4 * (A_pad + 2 * C) + 4 * A_pad)

        mlpp = pl.pallas_call(
            functools.partial(_supcon_labels_kernel,
                              inv_temperature=float(1.0 / temperature),
                              tile_rows=tA),
            in_specs=[
                pl.BlockSpec((tA, dim), lambda i: (i, 0)),             # anchor tile
                pl.BlockSpec((dim, C), lambda i: (0, 0),
                             pipeline_mode=pl.Buffered(1)),            # contrast, resident
                pl.BlockSpec((tA, 1), lambda i: (i, 0)),               # anchor labels
                pl.BlockSpec((1, C), lambda i: (0, 0),
                             pipeline_mode=pl.Buffered(1)),            # contrast labels
                pl.BlockSpec((1, C), lambda i: (0, 0),
                             pipeline_mode=pl.Buffered(1)),            # col keep
            ],
            cost_estimate=cost,
            compiler_params=pltpu.CompilerParams(
                dimension_semantics=("parallel",),
                vmem_limit_bytes=_vmem_limit(tA, C, dim, feat_bytes, 0)),
            **common_kwargs,
        )(anchor_feature, contrast_feature_t, anchor_labels, contrast_labels,
          col_keep)
    else:
        # Explicit [bsz, bsz] mask (mutually exclusive with labels): tiled
        # wrapper-side and shipped as int8 0/1 (quarter of the f32 DMA);
        # the diagonal logits_mask is still built in-kernel.
        # TODO(synk): non-binary (fractional) mask weights are not supported by
        # the int8 fast path; the reference docstring defines mask as 0/1.
        mask_i8 = (jnp.asarray(mask) != 0).astype(jnp.int8)
        mask_full = jnp.tile(mask_i8, (anchor_count, contrast_count))  # [A, C]
        mask_full = jnp.pad(mask_full, ((0, A_pad - A), (0, 0)))

        cost = pl.CostEstimate(
            flops=2 * A_pad * C * dim,
            transcendentals=A_pad * (C + 2),
            bytes_accessed=(A_pad + C) * dim * feat_bytes
                           + A_pad * C + 4 * A_pad)

        mlpp = pl.pallas_call(
            functools.partial(_supcon_mask_kernel,
                              inv_temperature=float(1.0 / temperature),
                              tile_rows=tA),
            in_specs=[
                pl.BlockSpec((tA, dim), lambda i: (i, 0)),             # anchor tile
                pl.BlockSpec((dim, C), lambda i: (0, 0),
                             pipeline_mode=pl.Buffered(1)),            # contrast, resident
                pl.BlockSpec((tA, C), lambda i: (i, 0)),               # int8 positive mask
            ],
            cost_estimate=cost,
            compiler_params=pltpu.CompilerParams(
                dimension_semantics=("parallel",),
                vmem_limit_bytes=_vmem_limit(tA, C, dim, feat_bytes, C)),
            **common_kwargs,
        )(anchor_feature, contrast_feature_t, mask_full)

    mlpp = mlpp[:A, 0]                                                # [A]
    loss = -(temperature / base_temperature) * mlpp
    loss = loss.reshape(anchor_count, bsz).mean()
    return 0.1 * loss


def _supcon_loss_ref(features, labels=None, mask=None, *,
                     temperature=0.1, contrast_mode='one', base_temperature=0.07,
                     feature_dtype=jnp.float32):
    """Pure-JAX reference mirroring the PyTorch forward (precision-matched)."""
    if features.ndim > 3:
        features = features.reshape(features.shape[0], features.shape[1], -1)
    features = features.astype(feature_dtype).astype(jnp.float32)
    ori_labels = labels
    bsz, n_views, _ = features.shape
    if labels is None and mask is None:
        mask = jnp.eye(bsz, dtype=jnp.float32)
    elif labels is not None:
        lc = labels.reshape(-1, 1)
        mask = (lc == lc.T).astype(jnp.float32)
        mask = jnp.where((ori_labels == 92)[None, :], 0.0, mask)
    else:
        mask = mask.astype(jnp.float32)
    contrast_feature = jnp.concatenate([features[:, v] for v in range(n_views)], 0)
    if contrast_mode == 'one':
        anchor_feature, anchor_count = features[:, 0], 1
    else:
        anchor_feature, anchor_count = contrast_feature, n_views
    A, C = bsz * anchor_count, bsz * n_views
    logits = anchor_feature @ contrast_feature.T / temperature
    logits = logits - jnp.max(logits, axis=1, keepdims=True)
    mask = jnp.tile(mask, (anchor_count, n_views))
    logits_mask = jnp.ones((A, C), jnp.float32).at[jnp.arange(A), jnp.arange(A)].set(0.0)
    if ori_labels is not None:
        logits_mask = jnp.where(jnp.tile(ori_labels == 92, n_views)[None, :],
                                0.0, logits_mask)
    mask = mask * logits_mask
    exp_logits = jnp.exp(logits) * logits_mask
    log_prob = logits - jnp.log(exp_logits.sum(1, keepdims=True))
    mlpp = (mask * log_prob).sum(1) / (mask.sum(1) + 1e-12)
    loss = -(temperature / base_temperature) * mlpp
    return 0.1 * loss.reshape(anchor_count, bsz).mean()


if __name__ == "__main__":
    key = jax.random.PRNGKey(0)
    k1, k2, k3, k4, k5 = jax.random.split(key, 5)
    fdt = jnp.bfloat16

    # Case 1: supervised (labels, incl. the label==92 column drop), n_views=1.
    feats1 = jax.random.normal(k1, (8, 1, 32), jnp.float32)
    feats1 = feats1 / jnp.linalg.norm(feats1, axis=-1, keepdims=True)
    labels1 = jnp.array([0, 1, 0, 2, 92, 1, 2, 0], dtype=jnp.int32)
    out1 = supcon_loss(feats1, labels=labels1, feature_dtype=fdt)
    ref1 = _supcon_loss_ref(feats1, labels=labels1, feature_dtype=fdt)

    # Case 2: no labels / no mask (mask = eye), n_views=2, contrast_mode='all'.
    feats2 = jax.random.normal(k2, (4, 2, 32), jnp.float32)
    feats2 = feats2 / jnp.linalg.norm(feats2, axis=-1, keepdims=True)
    out2 = supcon_loss(feats2, contrast_mode='all', feature_dtype=fdt)
    ref2 = _supcon_loss_ref(feats2, contrast_mode='all', feature_dtype=fdt)

    # Case 3: explicit [bsz, bsz] binary mask, n_views=2, contrast_mode='one'.
    feats3 = jax.random.normal(k3, (8, 2, 32), jnp.float32)
    feats3 = feats3 / jnp.linalg.norm(feats3, axis=-1, keepdims=True)
    m3 = (jax.random.uniform(k4, (8, 8)) > 0.5).astype(jnp.float32)
    out3 = supcon_loss(feats3, mask=m3, feature_dtype=fdt)
    ref3 = _supcon_loss_ref(feats3, mask=m3, feature_dtype=fdt)

    # Case 4: multi-step grid + row padding (A=80, tile=32 -> 3 grid steps).
    feats4 = jax.random.normal(k5, (80, 1, 32), jnp.float32)
    feats4 = feats4 / jnp.linalg.norm(feats4, axis=-1, keepdims=True)
    labels4 = jnp.array([0, 1, 2, 92, 0, 1, 2, 3, 92, 3] * 8, dtype=jnp.int32)
    out4 = supcon_loss(feats4, labels=labels4, tile_rows=32, feature_dtype=fdt)
    ref4 = _supcon_loss_ref(feats4, labels=labels4, feature_dtype=fdt)

    jax.block_until_ready((out1, out2, out3, out4))

    assert jnp.allclose(out1, ref1, rtol=1e-2, atol=1e-4), (out1, ref1)
    assert jnp.allclose(out2, ref2, rtol=1e-2, atol=1e-4), (out2, ref2)
    assert jnp.allclose(out3, ref3, rtol=1e-2, atol=1e-4), (out3, ref3)
    assert jnp.allclose(out4, ref4, rtol=1e-2, atol=1e-4), (out4, ref4)
    print("KERNEL_OK")
</pallas_src>

<mosaic_0001>
module attributes {stable_mosaic.version = 11 : i64} {
  func.func @_supcon_labels_kernel(%arg0: i32, %arg1: memref<32x32xbf16, #tpu.memory_space<vmem>>, %arg2: memref<32x8xbf16, #tpu.memory_space<vmem>>, %arg3: memref<32x1xi32, #tpu.memory_space<vmem>>, %arg4: memref<1x8xi32, #tpu.memory_space<vmem>>, %arg5: memref<1x8xi32, #tpu.memory_space<vmem>>, %arg6: memref<32x1xf32, #tpu.memory_space<vmem>>) attributes {dimension_semantics = [#tpu.dimension_semantics<parallel>], iteration_bounds = array<i64: 1>, scalar_prefetch = 0 : i64, scratch_operands = 0 : i64, tpu.core_type = #tpu.core_type<tc>, window_params = [{transform_indices = @transform_0, window_bounds = array<i64: 32, 32>}, {pipeline_mode = #tpu.pipeline_mode<synchronous>, transform_indices = @transform_1, window_bounds = array<i64: 32, 8>}, {transform_indices = @transform_2, window_bounds = array<i64: 32, 1>}, {pipeline_mode = #tpu.pipeline_mode<synchronous>, transform_indices = @transform_3, window_bounds = array<i64: 1, 8>}, {pipeline_mode = #tpu.pipeline_mode<synchronous>, transform_indices = @transform_4, window_bounds = array<i64: 1, 8>}, {transform_indices = @transform_5, window_bounds = array<i64: 32, 1>}]} {
    %c0 = arith.constant 0 : index
    %c0_0 = arith.constant 0 : index
    %0 = vector.load %arg1[%c0, %c0_0] : memref<32x32xbf16, #tpu.memory_space<vmem>>, vector<32x32xbf16>
    %c0_1 = arith.constant 0 : index
    %c0_2 = arith.constant 0 : index
    %1 = vector.load %arg2[%c0_1, %c0_2] : memref<32x8xbf16, #tpu.memory_space<vmem>>, vector<32x8xbf16>
    %cst = arith.constant dense<0.000000e+00> : vector<32x8xf32>
    %2 = tpu.matmul %0, %1, %cst {dimension_numbers = #tpu.dot_dimension_numbers<[1], [0], [0], [1], [0, 0, 1, 1], [], []>} : vector<32x32xbf16>, vector<32x8xbf16>, vector<32x8xf32> -> vector<32x8xf32>
    %cst_3 = arith.constant 1.000000e+01 : f32
    %3 = vector.broadcast %cst_3 : f32 to vector<32x8xf32>
    %4 = arith.mulf %2, %3 : vector<32x8xf32>
    %c32_i32 = arith.constant 32 : i32
    %5 = arith.muli %arg0, %c32_i32 : i32
    %6 = tpu.iota {dimensions = array<i32: 0>} : vector<32x1xi32>
    %7 = vector.broadcast %5 : i32 to vector<32x1xi32>
    %8 = arith.addi %6, %7 : vector<32x1xi32>
    %9 = tpu.iota {dimensions = array<i32: 1>} : vector<32x8xi32>
    %10 = vector.broadcast %8 : vector<32x1xi32> to vector<32x8xi32>
    %11 = arith.cmpi ne, %9, %10 : vector<32x8xi32>
    %c0_4 = arith.constant 0 : index
    %c0_5 = arith.constant 0 : index
    %12 = vector.load %arg5[%c0_4, %c0_5] : memref<1x8xi32, #tpu.memory_space<vmem>>, vector<1x8xi32>
    %c0_i32 = arith.constant 0 : i32
    %13 = vector.broadcast %c0_i32 : i32 to vector<1x8xi32>
    %14 = arith.cmpi ne, %12, %13 : vector<1x8xi32>
    %15 = vector.broadcast %14 : vector<1x8xi1> to vector<32x8xi1>
    %16 = arith.andi %11, %15 : vector<32x8xi1>
    %c0_6 = arith.constant 0 : index
    %c0_7 = arith.constant 0 : index
    %17 = vector.load %arg3[%c0_6, %c0_7] : memref<32x1xi32, #tpu.memory_space<vmem>>, vector<32x1xi32>
    %c0_8 = arith.constant 0 : index
    %c0_9 = arith.constant 0 : index
    %18 = vector.load %arg4[%c0_8, %c0_9] : memref<1x8xi32, #tpu.memory_space<vmem>>, vector<1x8xi32>
    %19 = vector.broadcast %17 : vector<32x1xi32> to vector<32x8xi32>
    %20 = vector.broadcast %18 : vector<1x8xi32> to vector<32x8xi32>
    %21 = arith.cmpi eq, %19, %20 : vector<32x8xi32>
    %22 = arith.andi %21, %16 : vector<32x8xi1>
    %cst_10 = arith.constant dense<0xFF800000> : vector<32xf32>
    %23 = vector.multi_reduction <maximumf>, %4, %cst_10 [1] : vector<32x8xf32> to vector<32xf32>
    %24 = vector.shape_cast %23 : vector<32xf32> to vector<32x1xf32>
    %25 = vector.broadcast %24 : vector<32x1xf32> to vector<32x8xf32>
    %26 = arith.subf %4, %25 : vector<32x8xf32>
    %cst_11 = arith.constant 0.000000e+00 : f32
    %27 = vector.broadcast %cst_11 : f32 to vector<32x8xf32>
    %28 = math.exp %26 : vector<32x8xf32>
    %29 = arith.select %16, %28, %27 : vector<32x8xi1>, vector<32x8xf32>
    %cst_12 = arith.constant dense<0.000000e+00> : vector<32xf32>
    %30 = vector.multi_reduction <add>, %29, %cst_12 [1] : vector<32x8xf32> to vector<32xf32>
    %31 = vector.shape_cast %30 : vector<32xf32> to vector<32x1xf32>
    %cst_13 = arith.constant 1.000000e+00 : f32
    %cst_14 = arith.constant 0.000000e+00 : f32
    %32 = vector.broadcast %cst_13 : f32 to vector<32x8xf32>
    %33 = vector.broadcast %cst_14 : f32 to vector<32x8xf32>
    %34 = arith.select %22, %32, %33 : vector<32x8xi1>, vector<32x8xf32>
    %cst_15 = arith.constant dense<0.000000e+00> : vector<32xf32>
    %35 = vector.multi_reduction <add>, %34, %cst_15 [1] : vector<32x8xf32> to vector<32xf32>
    %36 = vector.shape_cast %35 : vector<32xf32> to vector<32x1xf32>
    %37 = arith.select %22, %26, %27 : vector<32x8xi1>, vector<32x8xf32>
    %cst_16 = arith.constant dense<0.000000e+00> : vector<32xf32>
    %38 = vector.multi_reduction <add>, %37, %cst_16 [1] : vector<32x8xf32> to vector<32xf32>
    %39 = vector.shape_cast %38 : vector<32xf32> to vector<32x1xf32>
    %40 = math.log %31 : vector<32x1xf32>
    %41 = arith.mulf %40, %36 : vector<32x1xf32>
    %42 = arith.subf %39, %41 : vector<32x1xf32>
    %cst_17 = arith.constant 9.99999996E-13 : f32
    %43 = vector.broadcast %cst_17 : f32 to vector<32x1xf32>
    %44 = arith.addf %36, %43 : vector<32x1xf32>
    %45 = tpu.reciprocal %44 {approx = true} : vector<32x1xf32> -> vector<32x1xf32>
    %46 = arith.mulf %42, %45 : vector<32x1xf32>
    %c0_18 = arith.constant 0 : index
    %c0_19 = arith.constant 0 : index
    %47 = vector.load %arg6[%c0_18, %c0_19] : memref<32x1xf32, #tpu.memory_space<vmem>>, vector<32x1xf32>
    tpu.vector_store %arg6[%c0_18, %c0_19], %46 {strides = array<i32>} : memref<32x1xf32, #tpu.memory_space<vmem>>, vector<32x1xf32>,
    return
  }
  func.func @transform_0(%arg0: i32) -> (i32, i32) {
    %c0_i32 = arith.constant 0 : i32
    %c0_i32_0 = arith.constant 0 : i32
    return %arg0, %c0_i32 : i32, i32
  }
  func.func @transform_1(%arg0: i32) -> (i32, i32) {
    %c0_i32 = arith.constant 0 : i32
    %c0_i32_0 = arith.constant 0 : i32
    %c0_i32_1 = arith.constant 0 : i32
    return %c0_i32, %c0_i32_0 : i32, i32
  }
  func.func @transform_2(%arg0: i32) -> (i32, i32) {
    %c0_i32 = arith.constant 0 : i32
    %c0_i32_0 = arith.constant 0 : i32
    return %arg0, %c0_i32 : i32, i32
  }
  func.func @transform_3(%arg0: i32) -> (i32, i32) {
    %c0_i32 = arith.constant 0 : i32
    %c0_i32_0 = arith.constant 0 : i32
    %c0_i32_1 = arith.constant 0 : i32
    return %c0_i32, %c0_i32_0 : i32, i32
  }
  func.func @transform_4(%arg0: i32) -> (i32, i32) {
    %c0_i32 = arith.constant 0 : i32
    %c0_i32_0 = arith.constant 0 : i32
    %c0_i32_1 = arith.constant 0 : i32
    return %c0_i32, %c0_i32_0 : i32, i32
  }
  func.func @transform_5(%arg0: i32) -> (i32, i32) {
    %c0_i32 = arith.constant 0 : i32
    %c0_i32_0 = arith.constant 0 : i32
    return %arg0, %c0_i32 : i32, i32
  }
}

</mosaic_0001>

<llo_original>
// kernel: tpu_custom_call.1
$region0: #{tpu_custom_call.1}
  #allocation0 [shape = 'u32[]', space=smem, size = 0x4, offset = 0x4, fixed_abs, tag = 'smem constant byte address 0x4 - core index']
  #allocation1 [shape = 'u32[144,128]{1,0:T(1,128)}', space=vmem, size = 0x12000, scoped, tag = 'internal scratch']
  %s0 = inlined_call_operand.vmem [shape: bf16[32,32], index: 0, kind: input, shape index: {}]
  %s1 = inlined_call_operand.vmem [shape: bf16[32,8], index: 1, kind: input, shape index: {}]
  %s2 = inlined_call_operand.vmem [shape: s32[32,1], index: 2, kind: input, shape index: {}]
  %s3 = inlined_call_operand.vmem [shape: s32[1,8], index: 3, kind: input, shape index: {}]
  %s4 = inlined_call_operand.vmem [shape: s32[1,8], index: 4, kind: input, shape index: {}]
  %s5 = inlined_call_operand.vmem [shape: f32[32,1], index: 5, kind: output, shape index: {}]
  %s6 = sld [smem:[#allocation0]]
  $region30: #{tpu_custom_call.1} parent=0
    _
  %s8 = ssub.s32 1, %s6
  %s9 = scalar_select 0, %s8, %s6
  // Predicated region
  $region2: #{tpu_custom_call.1} parent=0 // pred_check
    _
  $region3: #{tpu_custom_call.1} parent=0 // pred_check_branch
    %11 = sbr.rel (0) target = $region5
  $region4: #{tpu_custom_call.1} parent=0 // pred_region
    _
  $region5: #{tpu_custom_call.1} parent=0 // pred_fallthru
    _
  // Predicated region
  $region6: #{tpu_custom_call.1} parent=0 // pred_check
    _
  $region7: #{tpu_custom_call.1} parent=0 // pred_check_branch
    %13 = sbr.rel (0) target = $region9
  $region8: #{tpu_custom_call.1} parent=0 // pred_region
    _
  $region9: #{tpu_custom_call.1} parent=0 // pred_fallthru
    _
  // Predicated region
  $region10: #{tpu_custom_call.1} parent=0 // pred_check
    _
  $region11: #{tpu_custom_call.1} parent=0 // pred_check_branch
    %15 = sbr.rel (0) target = $region13
  $region12: #{tpu_custom_call.1} parent=0 // pred_region
    _
  $region13: #{tpu_custom_call.1} parent=0 // pred_fallthru
    _
  // Predicated region
  $region14: #{tpu_custom_call.1} parent=0 // pred_check
    _
  $region15: #{tpu_custom_call.1} parent=0 // pred_check_branch
    %17 = sbr.rel (0) target = $region17
  $region16: #{tpu_custom_call.1} parent=0 // pred_region
    _
  $region17: #{tpu_custom_call.1} parent=0 // pred_fallthru
    _
  // Predicated region
  $region18: #{tpu_custom_call.1} parent=0 // pred_check
    _
  $region19: #{tpu_custom_call.1} parent=0 // pred_check_branch
    %19 = sbr.rel (0) target = $region21
  $region20: #{tpu_custom_call.1} parent=0 // pred_region
    _
  $region21: #{tpu_custom_call.1} parent=0 // pred_fallthru
    _
  %v21 = vld [vmem:[%s0] sm:$0xf]
  %v22 = vld [vmem:[%s0 + $0x4] sm:$0xf]
  %v23 = vld [vmem:[%s0 + $0x8] sm:$0xf]
  %v24 = vld [vmem:[%s0 + $0xc] sm:$0xf]
  %v25 = vld [vmem:[%s1] sm:$0xf]
  %v26 = vld [vmem:[%s1 + $0x4] sm:$0xf]
  %v27 = vld [vmem:[%s1 + $0x8] sm:$0xf]
  %v28 = vld [vmem:[%s1 + $0xc] sm:$0xf]
  %v33 = vunpack.c.l.b16 %v21
  %v34 = vunpack.c.l.b16 %v22
  %v35 = vunpack.c.l.b16 %v23
  %v36 = vunpack.c.l.b16 %v24
  %v37 = vpack.c.b16 %v34, %v33
  %v38 = vpack.c.b16 %v36, %v35
  %v43 = vunpack.c.l.b16 %v25
  %v44 = vunpack.c.l.b16 %v26
  %v45 = vunpack.c.l.b16 %v27
  %v46 = vunpack.c.l.b16 %v28
  %v47 = vpack.c.b16 %v44, %v43
  %v48 = vpack.c.b16 %v46, %v45
  %vm51 = vcmask 261120
  %v53 = vsel %vm51, %v37, 0
  %v56 = vsel %vm51, %v38, 0
  %58 = vmatprep.subr.bf16.mxu0 0
  %59 = vmatpush1.bf16.msra.mxu0 %v47
  %60 = vmatprep.subr.bf16.mxu0 0
  %61 = vmatpush1.bf16.msra.mxu0 %v48
  %62 = vmatprep.subr.bf16.mxu0 0
  %63 = vmatpush1.bf16.msra.mxu0 0
  %64 = vmatprep.subr.bf16.mxu0 0
  %65 = vmatpush1.bf16.msra.mxu0 0
  %66 = vmatprep.subr.bf16.mxu0 0
  %67 = vmatpush1.bf16.msra.mxu0 0
  %68 = vmatprep.subr.bf16.mxu0 0
  %69 = vmatpush1.bf16.msra.mxu0 0
  %70 = vmatprep.subr.bf16.mxu0 0
  %71 = vmatpush1.bf16.msra.mxu0 0
  %72 = vmatprep.subr.bf16.mxu0 0
  %73 = vmatpush1.bf16.msra.mxu0 0
  %74 = vmatprep.subr.bf16.mxu0 0
  %75 = vmatpush1.bf16.msra.mxu0 0
  %76 = vmatprep.subr.bf16.mxu0 0
  %77 = vmatpush1.bf16.msra.mxu0 0
  %78 = vmatprep.subr.bf16.mxu0 0
  %79 = vmatpush1.bf16.msra.mxu0 0
  %80 = vmatprep.subr.bf16.mxu0 0
  %81 = vmatpush1.bf16.msra.mxu0 0
  %82 = vmatprep.subr.bf16.mxu0 0
  %83 = vmatpush1.bf16.msra.mxu0 0
  %84 = vmatprep.subr.bf16.mxu0 0
  %85 = vmatpush1.bf16.msra.mxu0 0
  %86 = vmatprep.subr.bf16.mxu0 0
  %87 = vmatpush1.bf16.msra.mxu0 0
  %88 = vmatprep.subr.bf16.mxu0 0
  %89 = vmatpush1.bf16.msra.mxu0 0
  %90 = vmatprep.mubr.bf16.mxu0 0
  %91 = vmatmul.mubr.bf16.gmra.mrb[0].mxu0 %v53
  %v92 = vpop.f32.mrb[0].mxu0
  %v93 = vadd.f32 0.0, %v92
  %v94 = vpop.f32.mrb[0].mxu0
  %v95 = vpop.f32.mrb[0].mxu0
  %v96 = vadd.f32 0.0, %v95
  %v97 = vpop.f32.mrb[0].mxu0
  %98 = vmatprep.mubr.bf16.mxu0 0
  %99 = vmatmul.mubr.bf16.gmra.mrb[0].mxu0 %v56
  %v100 = vpop.f32.mrb[0].mxu0
  %v101 = vadd.f32 0.0, %v100
  %v102 = vpop.f32.mrb[0].mxu0
  %v103 = vpop.f32.mrb[0].mxu0
  %v104 = vadd.f32 0.0, %v103
  %v105 = vpop.f32.mrb[0].mxu0
  %106 = vdwg.mxu0
  %v107 = vmul.f32 %v93, 10.0
  %v108 = vmul.f32 %v96, 10.0
  %v109 = vmul.f32 %v101, 10.0
  %v110 = vmul.f32 %v104, 10.0
  %s111 = smul.u32 0, 32
  %v112 = vlaneseq
  %v113 = vshrl.u32 %v112, 7
  %v114 = vadd.s32 %v113, 8
  %v115 = vadd.s32 %v113, 16
  %v116 = vadd.s32 %v113, 24
  %v117 = vstv %s111
  %v118 = vadd.s32 %v113, %v117
  %v119 = vadd.s32 %v114, %v117
  %v120 = vadd.s32 %v115, %v117
  %v121 = vadd.s32 %v116, %v117
  %v122 = vlaneseq
  %v123 = vand.u32 %v122, 127
  %vm124 = vcmp.ne.s32.totalorder %v123, %v118
  %vm125 = vcmp.ne.s32.totalorder %v123, %v119
  %vm126 = vcmp.ne.s32.totalorder %v123, %v120
  %vm127 = vcmp.ne.s32.totalorder %v123, %v121
  %v128 = vld [vmem:[%s4] sm:$0x1]
  %vm129 = vcmp.ne.s32.totalorder %v128, 0
  %v130 = vsel %vm129, 1, 0
  %v131 = vlaneseq
  %v132 = vshrl.u32 %v131, 7
  %v133 = vsub.s32 0, %v132
  %v134 = vrot.slane %v130, %v133
  %vm135 = vcmp.eq.s32.totalorder %v134, 1
  %vm136 = vmand %vm124, %vm135
  %vm137 = vmand %vm125, %vm135
  %vm138 = vmand %vm126, %vm135
  %vm139 = vmand %vm127, %vm135
  %v140 = vld [vmem:[%s2] sm:$0xff]
  %v141 = vld [vmem:[%s2 + $0x8] sm:$0xff]
  %v142 = vld [vmem:[%s2 + $0x10] sm:$0xff]
  %v143 = vld [vmem:[%s2 + $0x18] sm:$0xff]
  %v144 = vld [vmem:[%s3] sm:$0x1]
  %145 = vset.pattern.permute.xlu0 0
  %146 = vperm.xlu0 %145, %v140
  %v147 = vpop.permute.xlu0 %146
  %148 = vset.pattern.permute.xlu0 0
  %149 = vperm.xlu0 %148, %v141
  %v150 = vpop.permute.xlu0 %149
  %151 = vset.pattern.permute.xlu0 0
  %152 = vperm.xlu0 %151, %v142
  %v153 = vpop.permute.xlu0 %152
  %154 = vset.pattern.permute.xlu0 0
  %155 = vperm.xlu0 %154, %v143
  %v156 = vpop.permute.xlu0 %155
  %v157 = vlaneseq
  %v158 = vshrl.u32 %v157, 7
  %v159 = vsub.s32 0, %v158
  %v160 = vrot.slane %v144, %v159
  %vm161 = vcmp.eq.s32.totalorder %v147, %v160
  %vm162 = vcmp.eq.s32.totalorder %v150, %v160
  %vm163 = vcmp.eq.s32.totalorder %v153, %v160
  %vm164 = vcmp.eq.s32.totalorder %v156, %v160
  %vm165 = vmand %vm161, %vm136
  %vm166 = vmand %vm162, %vm137
  %vm167 = vmand %vm163, %vm138
  %vm168 = vmand %vm164, %vm139
  %vm169 = vcmask 64512
  %v170 = vsel %vm169, %v107, -inf
  %171 = vmax.xlane.f32.xlu0 %v170
  %v172 = vpop.xlane.xlu0 %171
  %v173 = vsel %vm169, %v108, -inf
  %174 = vmax.xlane.f32.xlu0 %v173
  %v175 = vpop.xlane.xlu0 %174
  %v176 = vsel %vm169, %v109, -inf
  %177 = vmax.xlane.f32.xlu0 %v176
  %v178 = vpop.xlane.xlu0 %177
  %v179 = vsel %vm169, %v110, -inf
  %180 = vmax.xlane.f32.xlu0 %v179
  %v181 = vpop.xlane.xlu0 %180
  %v182 = vsub.f32 %v107, %v172
  %v183 = vsub.f32 %v108, %v175
  %v184 = vsub.f32 %v109, %v178
  %v185 = vsub.f32 %v110, %v181
  %v186 = vmul.f32 %v182, 1.442695
  %v187 = vpow.pop %v186
  %v188 = vmul.f32 %v183, 1.442695
  %v189 = vpow.pop %v188
  %v190 = vmul.f32 %v184, 1.442695
  %v191 = vpow.pop %v190
  %v192 = vmul.f32 %v185, 1.442695
  %v193 = vpow.pop %v192
  %v194 = vsel %vm136, %v187, 0.0
  %v195 = vsel %vm137, %v189, 0.0
  %v196 = vsel %vm138, %v191, 0.0
  %v197 = vsel %vm139, %v193, 0.0
  %v198 = vsel %vm169, %v194, 0.0
  %199 = vadd.xlane.f32.xlu0 %v198
  %v200 = vpop.xlane.xlu0 %199
  %v201 = vsel %vm169, %v195, 0.0
  %202 = vadd.xlane.f32.xlu0 %v201
  %v203 = vpop.xlane.xlu0 %202
  %v204 = vsel %vm169, %v196, 0.0
  %205 = vadd.xlane.f32.xlu0 %v204
  %v206 = vpop.xlane.xlu0 %205
  %v207 = vsel %vm169, %v197, 0.0
  %208 = vadd.xlane.f32.xlu0 %v207
  %v209 = vpop.xlane.xlu0 %208
  %v210 = vsel %vm165, 1.0, 0.0
  %v211 = vsel %vm166, 1.0, 0.0
  %v212 = vsel %vm167, 1.0, 0.0
  %v213 = vsel %vm168, 1.0, 0.0
  %v214 = vsel %vm169, %v210, 0.0
  %215 = vadd.xlane.f32.xlu0 %v214
  %v216 = vpop.xlane.xlu0 %215
  %v217 = vsel %vm169, %v211, 0.0
  %218 = vadd.xlane.f32.xlu0 %v217
  %v219 = vpop.xlane.xlu0 %218
  %v220 = vsel %vm169, %v212, 0.0
  %221 = vadd.xlane.f32.xlu0 %v220
  %v222 = vpop.xlane.xlu0 %221
  %v223 = vsel %vm169, %v213, 0.0
  %224 = vadd.xlane.f32.xlu0 %v223
  %v225 = vpop.xlane.xlu0 %224
  %v226 = vsel %vm165, %v182, 0.0
  %v227 = vsel %vm166, %v183, 0.0
  %v228 = vsel %vm167, %v184, 0.0
  %v229 = vsel %vm168, %v185, 0.0
  %v230 = vsel %vm169, %v226, 0.0
  %231 = vadd.xlane.f32.xlu0 %v230
  %v232 = vpop.xlane.xlu0 %231
  %v233 = vsel %vm169, %v227, 0.0
  %234 = vadd.xlane.f32.xlu0 %v233
  %v235 = vpop.xlane.xlu0 %234
  %v236 = vsel %vm169, %v228, 0.0
  %237 = vadd.xlane.f32.xlu0 %v236
  %v238 = vpop.xlane.xlu0 %237
  %v239 = vsel %vm169, %v229, 0.0
  %240 = vadd.xlane.f32.xlu0 %v239
  %v241 = vpop.xlane.xlu0 %240
  %v242 = vlog2.pop %v200
  %v243 = vmul.f32 %v242, 0.6931472
  %v244 = vlog2.pop %v203
  %v245 = vmul.f32 %v244, 0.6931472
  %v246 = vlog2.pop %v206
  %v247 = vmul.f32 %v246, 0.6931472
  %v248 = vlog2.pop %v209
  %v249 = vmul.f32 %v248, 0.6931472
  %v250 = vmul.f32 %v243, %v216
  %v251 = vmul.f32 %v245, %v219
  %v252 = vmul.f32 %v247, %v222
  %v253 = vmul.f32 %v249, %v225
  %v254 = vsub.f32 %v232, %v250
  %v255 = vsub.f32 %v235, %v251
  %v256 = vsub.f32 %v238, %v252
  %v257 = vsub.f32 %v241, %v253
  %v258 = vadd.f32 %v216, 1e-12
  %v259 = vadd.f32 %v219, 1e-12
  %v260 = vadd.f32 %v222, 1e-12
  %v261 = vadd.f32 %v225, 1e-12
  %v262 = vrcp.pop %v258
  %v263 = vrcp.pop %v259
  %v264 = vrcp.pop %v260
  %v265 = vrcp.pop %v261
  %v266 = vmul.f32 %v254, %v262
  %v267 = vmul.f32 %v255, %v263
  %v268 = vmul.f32 %v256, %v264
  %v269 = vmul.f32 %v257, %v265
  %vm270 = vcmask 7168
  %271 = vst.msk [vmem:[%s5] sm:$0xff] %vm270, %v266
  %272 = vst.msk [vmem:[%s5 + $0x8] sm:$0xff] %vm270, %v267
  %273 = vst.msk [vmem:[%s5 + $0x10] sm:$0xff] %vm270, %v268
  %274 = vst.msk [vmem:[%s5 + $0x18] sm:$0xff] %vm270, %v269
  // Predicated region
  $region22: #{tpu_custom_call.1} parent=0 // pred_check
    _
  $region23: #{tpu_custom_call.1} parent=0 // pred_check_branch
    %276 = sbr.rel (0) target = $region25
  $region24: #{tpu_custom_call.1} parent=0 // pred_region
    _
  $region25: #{tpu_custom_call.1} parent=0 // pred_fallthru
    _
  // Predicated region
  $region26: #{tpu_custom_call.1} parent=0 // pred_check
    _
  $region27: #{tpu_custom_call.1} parent=0 // pred_check_branch
    %278 = sbr.rel (0) target = $region29
  $region28: #{tpu_custom_call.1} parent=0 // pred_region
    _
  $region29: #{tpu_custom_call.1} parent=0 // pred_fallthru
    _

</llo_original>
